<compile_context>
chip_gen: v5e
topology: v5e:2x2
jax: 0.10.0
libtpu: 0.0.40
codegen_flags: <defaults>
</compile_context>

<pallas_src>
import functools

import jax
import jax.numpy as jnp
from jax import lax
from jax.experimental import pallas as pl
from jax.experimental.pallas import tpu as pltpu


def _det_from_cols(dh, dw, dd):
    """det(I + [dh | dw | dd]) expanded along the first (H-derivative) column."""
    a01, a11, a21 = dw[0], dw[1] + 1.0, dw[2]
    a02, a12, a22 = dd[0], dd[1], dd[2] + 1.0
    m0 = a11 * a22 - a12 * a21
    m1 = a01 * a22 - a02 * a21
    m2 = a01 * a12 - a02 * a11
    return (dh[0] + 1.0) * m0 - dh[1] * m1 + dh[2] * m2


def _jacdet_kernel(x_ref, *args, d_len, d_stride, with_halo):
    # x_ref:     (3, TH, WD)   current H-slab of the displacement field (VMEM)
    # with_halo: x_hbm_ref (B,3,H,WD) HBM alias, o_ref, halo_buf (2,3,1,WD),
    #            halo_sem (2,)
    # else:      o_ref only
    if with_halo:
        x_hbm_ref, o_ref, halo_buf, halo_sem = args
    else:
        (o_ref,) = args

    t = pl.program_id(1)
    n_t = pl.num_programs(1)
    th, wd = o_ref.shape

    if with_halo:
        # Kick off the two tiny halo-row DMAs (row just above / below this
        # slab, clamped at the volume edges).  They are awaited only after the
        # full-slab compute below, so the latency is hidden.
        b = pl.program_id(0)
        h_total = n_t * th
        row_lo = jnp.maximum(t * th - 1, 0)
        row_hi = jnp.minimum((t + 1) * th, h_total - 1)
        cp_lo = pltpu.make_async_copy(
            x_hbm_ref.at[b, :, pl.ds(row_lo, 1), :], halo_buf.at[0], halo_sem.at[0])
        cp_hi = pltpu.make_async_copy(
            x_hbm_ref.at[b, :, pl.ds(row_hi, 1), :], halo_buf.at[1], halo_sem.at[1])
        cp_lo.start()
        cp_hi.start()

    u = x_ref[...].astype(jnp.float32)                    # (3, TH, WD)

    def sh(v, s, axis):                                   # jnp.roll semantics (XLU)
        return pltpu.roll(v, shift=s % v.shape[axis], axis=axis)

    # In-plane central differences via lane rolls.  Wrapped values only land on
    # W/D boundary voxels, whose determinant is rewritten by the replicate
    # clamp below, so no masking is needed here.
    d_w = 0.5 * (sh(u, -d_stride, 2) - sh(u, d_stride, 2))   # d u_i / dW
    d_d = 0.5 * (sh(u, -1, 2) - sh(u, 1, 2))                 # d u_i / dD
    # H central difference via sublane roll — wrong only at slab rows 0 / TH-1,
    # which are fixed with two row-sized writes below (no full-field selects).
    d_h = 0.5 * (sh(u, -1, 1) - sh(u, 1, 1))                 # d u_i / dH

    det = _det_from_cols(d_h, d_w, d_d)                      # (TH, WD)

    def lane_clamp(v):
        # Replicate clamp along D then W (== PyTorch replicate padding of the
        # derivative channels in those dims; det is pointwise in the channels).
        rows = v.shape[0]
        lane = lax.broadcasted_iota(jnp.int32, (rows, wd), 1)
        k = lane % d_stride                                  # index along (padded) D
        v = jnp.where(k == 0, sh(v, -1, 1),
            jnp.where(k == d_len - 1, sh(v, 1, 1), v))
        v = jnp.where(lane < d_stride, sh(v, -d_stride, 1),            # first W row
            jnp.where(lane >= wd - d_stride, sh(v, d_stride, 1), v))   # last W row
        return v

    det = lane_clamp(det)
    o_ref[...] = det.astype(o_ref.dtype)                     # bulk, lane-dense store

    # --- per-slab edge rows (only 2 rows ever need fixing) --------------------
    # Global top / bottom row: H-axis replicate clamp = copy the adjacent,
    # already D/W-clamped row.  Gated so interior tiles pay nothing.
    @pl.when(t == 0)
    def _():
        o_ref[pl.ds(0, 1), :] = det[1:2, :].astype(o_ref.dtype)

    @pl.when(t == n_t - 1)
    def _():
        o_ref[pl.ds(th - 1, 1), :] = det[th - 2:th - 1, :].astype(o_ref.dtype)

    if with_halo:
        # Interior slab edges: redo the H central difference with the halo rows.
        cp_lo.wait()
        cp_hi.wait()
        lo = halo_buf[0, :, :, :].astype(jnp.float32)         # (3, 1, WD) row t*TH-1
        hi = halo_buf[1, :, :, :].astype(jnp.float32)         # (3, 1, WD) row (t+1)*TH

        @pl.when(t > 0)
        def _():
            dh0 = 0.5 * (u[:, 1:2, :] - lo)
            row = _det_from_cols(dh0, d_w[:, 0:1, :], d_d[:, 0:1, :])
            o_ref[pl.ds(0, 1), :] = lane_clamp(row).astype(o_ref.dtype)

        @pl.when(t < n_t - 1)
        def _():
            dhl = 0.5 * (hi - u[:, th - 2:th - 1, :])
            row = _det_from_cols(dhl, d_w[:, th - 1:th, :], d_d[:, th - 1:th, :])
            o_ref[pl.ds(th - 1, 1), :] = lane_clamp(row).astype(o_ref.dtype)


def _vmem_capacity_bytes():
    try:
        return int(pltpu.get_tpu_info().vmem_capacity_bytes)
    except Exception:
        return 128 << 20          # v5e / v6e default if the query is unavailable


def _pick_tile_h(H, B, WD, itemsize, sub, budget):
    """Largest H tile that divides H, is a multiple of the sublane packing (or
    all of H) and keeps one (3, tile_h, WD) input slab under `budget` bytes.
    Prefers an even total grid count so both v7x TensorCores get work."""
    cands = [t for t in range(sub, H, sub) if H % t == 0] + [H]
    ok = [t for t in cands if 3 * t * WD * itemsize <= budget]
    if not ok:
        return min(cands)
    best = max(ok)
    if (B * (H // best)) % 2 == 1:
        even = [t for t in ok if (B * (H // t)) % 2 == 0 and 2 * t >= best]
        if even:
            best = max(even)
    return best


@functools.partial(jax.jit, static_argnames=("tile_h",))
def jacobian_of_ddf(x, tile_h=None):
    """x: (B, 3, H, W, D) displacement field -> (B, 1, H, W, D) jacobian det."""
    B, C, H, W, D = x.shape
    if C != 3:
        raise ValueError(f"channel dim must be 3, got {C}")
    if min(H, W, D) < 3:
        raise ValueError("H, W, D must all be >= 3 for central differences")

    itemsize = jnp.dtype(x.dtype).itemsize
    sub = max(8, 32 // itemsize)              # sublane packing: f32 8, bf16 16, i8 32

    # Pad D so W*D_pad is a multiple of 128 -> unmasked lane-dense stores.
    pad_d = 0
    if (W * D) % 128 != 0:
        for p in range(1, 129):
            if (W * (D + p)) % 128 == 0:
                pad_d = p
                break
        if pad_d > max(D, 16):
            # TODO(synk): pad W (or tile W/D) instead when D-padding is too costly.
            pad_d = 0
    Dp = D + pad_d
    WD = W * Dp

    cap = _vmem_capacity_bytes()
    budget = (7 << 20) if cap >= (96 << 20) else (7 << 19)   # 7 MiB / 3.5 MiB slab
    if tile_h is None:
        tile_h = _pick_tile_h(H, B, WD, itemsize, sub, budget)
    if H % tile_h != 0 or not (tile_h % sub == 0 or tile_h == H) or tile_h < 2:
        raise ValueError(f"bad tile_h={tile_h} for H={H} (sublane multiple {sub})")
    n_tiles = H // tile_h
    with_halo = n_tiles > 1

    if pad_d:
        x = jnp.pad(x, ((0, 0), (0, 0), (0, 0), (0, 0), (0, pad_d)), mode="edge")
    x2 = x.reshape(B, 3, H, WD)                              # lane-dense layout

    # Scoped-VMEM budget: double-buffered I/O + live f32 temporaries + halo,
    # capped at 75% of physical VMEM (v7x has only 64 MiB per TC).
    in_slab = 3 * tile_h * WD * itemsize
    out_slab = tile_h * WD * itemsize
    io_bytes = 2 * (in_slab + out_slab)                      # x2 double buffering
    tmp_bytes = 17 * tile_h * WD * 4                         # f32 temporaries (upper bound)
    halo_bytes = 2 * 3 * WD * itemsize
    vmem_limit = int(min(max(io_bytes + tmp_bytes + halo_bytes + (4 << 20), 32 << 20),
                         (cap * 3) // 4))

    kernel = functools.partial(_jacdet_kernel, d_len=D, d_stride=Dp,
                               with_halo=with_halo)

    in_specs = [pl.BlockSpec((None, 3, tile_h, WD), lambda b, t: (b, 0, t, 0))]
    operands = (x2,)
    scratch = []
    if with_halo:
        in_specs.append(pl.BlockSpec(memory_space=pl.ANY))   # HBM alias, halo rows
        operands = (x2, x2)
        scratch = [pltpu.VMEM((2, 3, 1, WD), x.dtype),
                   pltpu.SemaphoreType.DMA((2,))]

    out = pl.pallas_call(
        kernel,
        out_shape=jax.ShapeDtypeStruct((B, 1, H, WD), x.dtype),
        grid_spec=pltpu.PrefetchScalarGridSpec(
            num_scalar_prefetch=0,
            grid=(B, n_tiles),
            in_specs=in_specs,
            out_specs=pl.BlockSpec((None, None, tile_h, WD),
                                   lambda b, t: (b, 0, t, 0)),
            scratch_shapes=scratch,
        ),
        compiler_params=pltpu.CompilerParams(
            dimension_semantics=("parallel", "parallel"),
            vmem_limit_bytes=vmem_limit),
    )(*operands)

    out = out.reshape(B, 1, H, W, Dp)
    if pad_d:
        out = out[..., :D]
    return out


def _ref_jacobian_of_ddf(x):
    """Pure-JAX reference with the exact PyTorch semantics: valid central
    differences, replicate padding in all three spatial dims, +I, 3x3 det."""
    u = x
    dH = 0.5 * (u[:, :, 2:, 1:-1, 1:-1] - u[:, :, :-2, 1:-1, 1:-1])
    dW = 0.5 * (u[:, :, 1:-1, 2:, 1:-1] - u[:, :, 1:-1, :-2, 1:-1])
    dD = 0.5 * (u[:, :, 1:-1, 1:-1, 2:] - u[:, :, 1:-1, 1:-1, :-2])
    J = jnp.stack([dH, dW, dD], axis=2)                 # (B, 3, 3, H-2, W-2, D-2)
    J = J + jnp.eye(3, dtype=J.dtype).reshape(1, 3, 3, 1, 1, 1)
    det = jnp.linalg.det(jnp.moveaxis(J, (1, 2), (4, 5)))
    det = jnp.pad(det, ((0, 0), (1, 1), (1, 1), (1, 1)), mode="edge")
    return det[:, None]


if __name__ == "__main__":
    key = jax.random.PRNGKey(0)

    # Case 1: WD multiple of 128, auto tile (single slab -> no halo machinery).
    B, C, H, W, D = 2, 3, 16, 16, 16
    x = 0.1 * jax.random.normal(key, (B, C, H, W, D), dtype=jnp.float32)
    ref = _ref_jacobian_of_ddf(x)
    out_auto = jacobian_of_ddf(x)               # single H slab
    out_tiled = jacobian_of_ddf(x, tile_h=8)    # two H slabs: exercises halo DMA

    # Case 2: W*D = 96 (not a multiple of 128) -> D edge-padded to 16 in the
    # wrapper; auto tile picks 2 slabs -> exercises padding + halo together.
    x3 = 0.1 * jax.random.normal(jax.random.PRNGKey(1), (1, 3, 16, 8, 12),
                                 dtype=jnp.float32)
    ref3 = _ref_jacobian_of_ddf(x3)
    out3 = jacobian_of_ddf(x3)

    jax.block_until_ready((out_auto, out_tiled, out3))

    assert out_auto.shape == (B, 1, H, W, D), out_auto.shape
    assert out3.shape == (1, 1, 16, 8, 12), out3.shape
    err_a = float(jnp.max(jnp.abs(out_auto - ref)))
    err_t = float(jnp.max(jnp.abs(out_tiled - ref)))
    err_p = float(jnp.max(jnp.abs(out3 - ref3)))
    assert err_a < 1e-4, f"max abs error (auto tile) {err_a}"
    assert err_t < 1e-4, f"max abs error (tile_h=8) {err_t}"
    assert err_p < 1e-4, f"max abs error (padded WD) {err_p}"
    print("KERNEL_OK")
</pallas_src>

<mosaic_0001>
module attributes {stable_mosaic.version = 11 : i64} {
  func.func @_jacdet_kernel(%arg0: i32, %arg1: i32, %arg2: memref<1x3x16x256xf32, #tpu.memory_space<vmem>>, %arg3: memref<1x1x16x256xf32, #tpu.memory_space<vmem>>) attributes {dimension_semantics = [#tpu.dimension_semantics<parallel>, #tpu.dimension_semantics<parallel>], iteration_bounds = array<i64: 2, 1>, scalar_prefetch = 0 : i64, scratch_operands = 0 : i64, tpu.core_type = #tpu.core_type<tc>, window_params = [{transform_indices = @transform_0, window_bounds = array<i64: 1, 3, 16, 256>}, {transform_indices = @transform_1, window_bounds = array<i64: 1, 1, 16, 256>}]} {
    %c0 = arith.constant 0 : index
    %c0_0 = arith.constant 0 : index
    %c0_1 = arith.constant 0 : index
    %c0_2 = arith.constant 0 : index
    %0 = vector.load %arg2[%c0, %c0_0, %c0_1, %c0_2] : memref<1x3x16x256xf32, #tpu.memory_space<vmem>>, vector<1x3x16x256xf32>
    %1 = vector.shape_cast %0 : vector<1x3x16x256xf32> to vector<3x16x256xf32>
    %c240_i32 = arith.constant 240 : i32
    %2 = tpu.dynamic_rotate %1 by %c240_i32 dim 2 : vector<3x16x256xf32>, i32 -> vector<3x16x256xf32>
    %c16_i32 = arith.constant 16 : i32
    %3 = tpu.dynamic_rotate %1 by %c16_i32 dim 2 : vector<3x16x256xf32>, i32 -> vector<3x16x256xf32>
    %4 = arith.subf %2, %3 : vector<3x16x256xf32>
    %cst = arith.constant 5.000000e-01 : f32
    %5 = vector.broadcast %cst : f32 to vector<3x16x256xf32>
    %6 = arith.mulf %5, %4 : vector<3x16x256xf32>
    %c255_i32 = arith.constant 255 : i32
    %7 = tpu.dynamic_rotate %1 by %c255_i32 dim 2 : vector<3x16x256xf32>, i32 -> vector<3x16x256xf32>
    %c1_i32 = arith.constant 1 : i32
    %8 = tpu.dynamic_rotate %1 by %c1_i32 dim 2 : vector<3x16x256xf32>, i32 -> vector<3x16x256xf32>
    %9 = arith.subf %7, %8 : vector<3x16x256xf32>
    %cst_3 = arith.constant 5.000000e-01 : f32
    %10 = vector.broadcast %cst_3 : f32 to vector<3x16x256xf32>
    %11 = arith.mulf %10, %9 : vector<3x16x256xf32>
    %c15_i32 = arith.constant 15 : i32
    %12 = tpu.dynamic_rotate %1 by %c15_i32 dim 1 : vector<3x16x256xf32>, i32 -> vector<3x16x256xf32>
    %c1_i32_4 = arith.constant 1 : i32
    %13 = tpu.dynamic_rotate %1 by %c1_i32_4 dim 1 : vector<3x16x256xf32>, i32 -> vector<3x16x256xf32>
    %14 = arith.subf %12, %13 : vector<3x16x256xf32>
    %cst_5 = arith.constant 5.000000e-01 : f32
    %15 = vector.broadcast %cst_5 : f32 to vector<3x16x256xf32>
    %16 = arith.mulf %15, %14 : vector<3x16x256xf32>
    %17 = vector.extract_strided_slice %6 {offsets = [0, 0, 0], sizes = [1, 16, 256], strides = [1, 1, 1]} : vector<3x16x256xf32> to vector<1x16x256xf32>
    %18 = vector.shape_cast %17 : vector<1x16x256xf32> to vector<16x256xf32>
    %19 = vector.extract_strided_slice %6 {offsets = [1, 0, 0], sizes = [1, 16, 256], strides = [1, 1, 1]} : vector<3x16x256xf32> to vector<1x16x256xf32>
    %20 = vector.shape_cast %19 : vector<1x16x256xf32> to vector<16x256xf32>
    %cst_6 = arith.constant 1.000000e+00 : f32
    %21 = vector.broadcast %cst_6 : f32 to vector<16x256xf32>
    %22 = arith.addf %20, %21 : vector<16x256xf32>
    %23 = vector.extract_strided_slice %6 {offsets = [2, 0, 0], sizes = [1, 16, 256], strides = [1, 1, 1]} : vector<3x16x256xf32> to vector<1x16x256xf32>
    %24 = vector.shape_cast %23 : vector<1x16x256xf32> to vector<16x256xf32>
    %25 = vector.extract_strided_slice %11 {offsets = [0, 0, 0], sizes = [1, 16, 256], strides = [1, 1, 1]} : vector<3x16x256xf32> to vector<1x16x256xf32>
    %26 = vector.shape_cast %25 : vector<1x16x256xf32> to vector<16x256xf32>
    %27 = vector.extract_strided_slice %11 {offsets = [1, 0, 0], sizes = [1, 16, 256], strides = [1, 1, 1]} : vector<3x16x256xf32> to vector<1x16x256xf32>
    %28 = vector.shape_cast %27 : vector<1x16x256xf32> to vector<16x256xf32>
    %29 = vector.extract_strided_slice %11 {offsets = [2, 0, 0], sizes = [1, 16, 256], strides = [1, 1, 1]} : vector<3x16x256xf32> to vector<1x16x256xf32>
    %30 = vector.shape_cast %29 : vector<1x16x256xf32> to vector<16x256xf32>
    %cst_7 = arith.constant 1.000000e+00 : f32
    %31 = vector.broadcast %cst_7 : f32 to vector<16x256xf32>
    %32 = arith.addf %30, %31 : vector<16x256xf32>
    %33 = arith.mulf %22, %32 : vector<16x256xf32>
    %34 = arith.mulf %28, %24 : vector<16x256xf32>
    %35 = arith.subf %33, %34 : vector<16x256xf32>
    %36 = arith.mulf %18, %32 : vector<16x256xf32>
    %37 = arith.mulf %26, %24 : vector<16x256xf32>
    %38 = arith.subf %36, %37 : vector<16x256xf32>
    %39 = arith.mulf %18, %28 : vector<16x256xf32>
    %40 = arith.mulf %26, %22 : vector<16x256xf32>
    %41 = arith.subf %39, %40 : vector<16x256xf32>
    %42 = vector.extract_strided_slice %16 {offsets = [0, 0, 0], sizes = [1, 16, 256], strides = [1, 1, 1]} : vector<3x16x256xf32> to vector<1x16x256xf32>
    %43 = vector.shape_cast %42 : vector<1x16x256xf32> to vector<16x256xf32>
    %cst_8 = arith.constant 1.000000e+00 : f32
    %44 = vector.broadcast %cst_8 : f32 to vector<16x256xf32>
    %45 = arith.addf %43, %44 : vector<16x256xf32>
    %46 = arith.mulf %45, %35 : vector<16x256xf32>
    %47 = vector.extract_strided_slice %16 {offsets = [1, 0, 0], sizes = [1, 16, 256], strides = [1, 1, 1]} : vector<3x16x256xf32> to vector<1x16x256xf32>
    %48 = vector.shape_cast %47 : vector<1x16x256xf32> to vector<16x256xf32>
    %49 = arith.mulf %48, %38 : vector<16x256xf32>
    %50 = arith.subf %46, %49 : vector<16x256xf32>
    %51 = vector.extract_strided_slice %16 {offsets = [2, 0, 0], sizes = [1, 16, 256], strides = [1, 1, 1]} : vector<3x16x256xf32> to vector<1x16x256xf32>
    %52 = vector.shape_cast %51 : vector<1x16x256xf32> to vector<16x256xf32>
    %53 = arith.mulf %52, %41 : vector<16x256xf32>
    %54 = arith.addf %50, %53 : vector<16x256xf32>
    %55 = tpu.iota {dimensions = array<i32: 1>} : vector<16x256xi32>
    %c16_i32_9 = arith.constant 16 : i32
    %c0_i32 = arith.constant 0 : i32
    %56 = arith.cmpi eq, %c16_i32_9, %c0_i32 : i32
    %c1_i32_10 = arith.constant 1 : i32
    %57 = arith.select %56, %c1_i32_10, %c16_i32_9 : i32
    %58 = vector.broadcast %57 : i32 to vector<16x256xi32>
    %59 = arith.remsi %55, %58 : vector<16x256xi32>
    %c0_i32_11 = arith.constant 0 : i32
    %60 = vector.broadcast %c0_i32_11 : i32 to vector<16x256xi32>
    %61 = arith.cmpi ne, %59, %60 : vector<16x256xi32>
    %c0_i32_12 = arith.constant 0 : i32
    %62 = vector.broadcast %c0_i32_12 : i32 to vector<16x256xi32>
    %63 = arith.cmpi slt, %59, %62 : vector<16x256xi32>
    %c0_i32_13 = arith.constant 0 : i32
    %64 = arith.cmpi slt, %57, %c0_i32_13 : i32
    %65 = vector.broadcast %64 : i1 to vector<16x256xi1>
    %66 = vector.broadcast %65 : vector<16x256xi1> to vector<16x256xi1>
    %67 = arith.xori %63, %66 : vector<16x256xi1>
    %68 = arith.andi %67, %61 : vector<16x256xi1>
    %69 = vector.broadcast %57 : i32 to vector<16x256xi32>
    %70 = arith.addi %59, %69 : vector<16x256xi32>
    %71 = arith.select %68, %70, %59 : vector<16x256xi1>, vector<16x256xi32>
    %c0_i32_14 = arith.constant 0 : i32
    %72 = vector.broadcast %c0_i32_14 : i32 to vector<16x256xi32>
    %73 = arith.cmpi eq, %71, %72 : vector<16x256xi32>
    %c255_i32_15 = arith.constant 255 : i32
    %74 = tpu.dynamic_rotate %54 by %c255_i32_15 dim 1 : vector<16x256xf32>, i32 -> vector<16x256xf32>
    %c15_i32_16 = arith.constant 15 : i32
    %75 = vector.broadcast %c15_i32_16 : i32 to vector<16x256xi32>
    %76 = arith.cmpi eq, %71, %75 : vector<16x256xi32>
    %c1_i32_17 = arith.constant 1 : i32
    %77 = tpu.dynamic_rotate %54 by %c1_i32_17 dim 1 : vector<16x256xf32>, i32 -> vector<16x256xf32>
    %78 = arith.select %76, %77, %54 : vector<16x256xi1>, vector<16x256xf32>
    %79 = arith.select %73, %74, %78 : vector<16x256xi1>, vector<16x256xf32>
    %c16_i32_18 = arith.constant 16 : i32
    %80 = vector.broadcast %c16_i32_18 : i32 to vector<16x256xi32>
    %81 = arith.cmpi slt, %55, %80 : vector<16x256xi32>
    %c240_i32_19 = arith.constant 240 : i32
    %82 = tpu.dynamic_rotate %79 by %c240_i32_19 dim 1 : vector<16x256xf32>, i32 -> vector<16x256xf32>
    %c240_i32_20 = arith.constant 240 : i32
    %83 = vector.broadcast %c240_i32_20 : i32 to vector<16x256xi32>
    %84 = arith.cmpi sge, %55, %83 : vector<16x256xi32>
    %c16_i32_21 = arith.constant 16 : i32
    %85 = tpu.dynamic_rotate %79 by %c16_i32_21 dim 1 : vector<16x256xf32>, i32 -> vector<16x256xf32>
    %86 = arith.select %84, %85, %79 : vector<16x256xi1>, vector<16x256xf32>
    %87 = arith.select %81, %82, %86 : vector<16x256xi1>, vector<16x256xf32>
    %c0_22 = arith.constant 0 : index
    %c0_23 = arith.constant 0 : index
    %c0_24 = arith.constant 0 : index
    %c0_25 = arith.constant 0 : index
    %88 = vector.load %arg3[%c0_22, %c0_23, %c0_24, %c0_25] : memref<1x1x16x256xf32, #tpu.memory_space<vmem>>, vector<1x1x16x256xf32>
    %89 = vector.shape_cast %88 : vector<1x1x16x256xf32> to vector<16x256xf32>
    %90 = vector.shape_cast %87 : vector<16x256xf32> to vector<1x1x16x256xf32>
    tpu.vector_store %arg3[%c0_22, %c0_23, %c0_24, %c0_25], %90 {strides = array<i32>} : memref<1x1x16x256xf32, #tpu.memory_space<vmem>>, vector<1x1x16x256xf32>,
    %c0_i32_26 = arith.constant 0 : i32
    %91 = arith.cmpi eq, %arg1, %c0_i32_26 : i32
    %92 = arith.extui %91 : i1 to i32
    %c0_i32_27 = arith.constant 0 : i32
    %93 = arith.cmpi ne, %92, %c0_i32_27 : i32
    scf.if %93 {
      %97 = vector.extract_strided_slice %87 {offsets = [1, 0], sizes = [1, 256], strides = [1, 1]} : vector<16x256xf32> to vector<1x256xf32>
      %c0_30 = arith.constant 0 : index
      %c0_31 = arith.constant 0 : index
      %c0_32 = arith.constant 0 : index
      %c0_33 = arith.constant 0 : index
      %98 = vector.load %arg3[%c0_30, %c0_31, %c0_32, %c0_33] : memref<1x1x16x256xf32, #tpu.memory_space<vmem>>, vector<1x1x1x256xf32>
      %99 = vector.shape_cast %98 : vector<1x1x1x256xf32> to vector<1x256xf32>
      %100 = vector.shape_cast %97 : vector<1x256xf32> to vector<1x1x1x256xf32>
      tpu.vector_store %arg3[%c0_30, %c0_31, %c0_32, %c0_33], %100 {strides = array<i32>} : memref<1x1x16x256xf32, #tpu.memory_space<vmem>>, vector<1x1x1x256xf32>,
    } else {
    }
    %c0_i32_28 = arith.constant 0 : i32
    %94 = arith.cmpi eq, %arg1, %c0_i32_28 : i32
    %95 = arith.extui %94 : i1 to i32
    %c0_i32_29 = arith.constant 0 : i32
    %96 = arith.cmpi ne, %95, %c0_i32_29 : i32
    scf.if %96 {
      %97 = vector.extract_strided_slice %87 {offsets = [14, 0], sizes = [1, 256], strides = [1, 1]} : vector<16x256xf32> to vector<1x256xf32>
      %c0_30 = arith.constant 0 : index
      %c0_31 = arith.constant 0 : index
      %c15 = arith.constant 15 : index
      %c0_32 = arith.constant 0 : index
      %98 = vector.load %arg3[%c0_30, %c0_31, %c15, %c0_32] : memref<1x1x16x256xf32, #tpu.memory_space<vmem>>, vector<1x1x1x256xf32>
      %99 = vector.shape_cast %98 : vector<1x1x1x256xf32> to vector<1x256xf32>
      %100 = vector.shape_cast %97 : vector<1x256xf32> to vector<1x1x1x256xf32>
      tpu.vector_store %arg3[%c0_30, %c0_31, %c15, %c0_32], %100 {strides = array<i32>} : memref<1x1x16x256xf32, #tpu.memory_space<vmem>>, vector<1x1x1x256xf32>,
    } else {
    }
    return
  }
  func.func @transform_0(%arg0: i32, %arg1: i32) -> (i32, i32, i32, i32) {
    %c0_i32 = arith.constant 0 : i32
    %c0_i32_0 = arith.constant 0 : i32
    %c0_i32_1 = arith.constant 0 : i32
    return %arg0, %c0_i32, %arg1, %c0_i32_0 : i32, i32, i32, i32
  }
  func.func @transform_1(%arg0: i32, %arg1: i32) -> (i32, i32, i32, i32) {
    %c0_i32 = arith.constant 0 : i32
    %c0_i32_0 = arith.constant 0 : i32
    %c0_i32_1 = arith.constant 0 : i32
    return %arg0, %c0_i32, %arg1, %c0_i32_0 : i32, i32, i32, i32
  }
}

</mosaic_0001>

<llo_original>
// kernel: jacobian_of_ddf.1
$region0: #{jacobian_of_ddf.1}
  #allocation0 [shape = 'u32[]', space=smem, size = 0x4, offset = 0x4, fixed_abs, tag = 'smem constant byte address 0x4 - core index']
  #allocation1 [shape = 'u32[72,128]{1,0:T(1,128)}', space=vmem, size = 0x9000, scoped, tag = 'internal scratch']
  %s0 = inlined_call_operand.vmem [shape: f32[2,3,16,256], index: 0, kind: input, shape index: {}]
  %s1 = inlined_call_operand.vmem [shape: f32[2,1,16,256], index: 1, kind: output, shape index: {}]
  %s2 = sld [smem:[#allocation0]]
  $region41: #{jacobian_of_ddf.1} parent=0
    _
  %s4 = ssub.s32 1, %s2
  %s5 = scalar_select 0, %s4, %s2
  loop: start=0, step=1, limit=4
  $region2: #{jacobian_of_ddf.1} parent=0 // loop_pre_header
    _
  $region3: #{jacobian_of_ddf.1} parent=0 // loop_header
    %s7 = sphi 0, %s11
    %p8 = scmp.ge.s32.totalorder %s7, 4
    %s14 = sphi 0, %s26
    %s15 = sphi 0, %s22
    %s16 = sphi 0, %s14
    %s17 = sphi 0, %s15
    %s18 = sphi 0, %s16
    %s19 = sphi 0, %s17
    %s31 = sphi 0, %s33
    %s34 = sphi 0, %s31
    %s35 = sphi 0, %s34
    %s51 = sphi 0, %s35
    %s59 = sphi 0, %s61
    %s62 = sphi 0, %s59
    %s63 = sphi 0, %s62
    %s79 = sphi 0, %s63
  $region4: #{jacobian_of_ddf.1} parent=0 // loop_header_branch
    %10 = sbr.rel (%p8) target = $region8
  $region5: #{jacobian_of_ddf.1} parent=0 // loop_body
    %s12 = ssub.s32 %s7, 1
    %s13 = ssub.s32 %s7, 2
    %s20 = sadd.s32 1, %s15
    %p21 = scmp.ge.s32.totalorder %s20, 1
    %s22 = scalar_select %p21, 0, %s20
    %s23 = sadd.s32 1, %s14
    %s24 = scalar_select %p21, %s23, %s14
    %p25 = scmp.ge.s32.totalorder %s24, 2
    %s26 = scalar_select %p25, 0, %s24
    %s27 = ssub.s32 %s14, %s26
    %s28 = ssub.s32 %s15, %s22
    %s29 = sor.u32 %s27, %s28
    %p30 = scmp.eq.s32.totalorder %s29, 0
    %s32 = sadd.s32 %s31, 1
    %s33 = scalar_select %p30, %s31, %s32
    %p36 = pneg %p30
    %p37 = scmp.eq.s32.totalorder %s7, 1
    %p38 = por %p36, %p37
    %p39 = scmp.ne.s32.totalorder %s31, %s34
    %p40 = scmp.eq.s32.totalorder %s7, 0
    %p41 = por %p39, %p40
    %p42 = scmp.ne.s32.totalorder %s31, %s34
    %p43 = scmp.eq.s32.totalorder %s12, 1
    %p44 = por %p42, %p43
    %p45 = scmp.ne.s32.totalorder %s34, %s35
    %p46 = scmp.eq.s32.totalorder %s12, 0
    %p47 = por %p45, %p46
    %p48 = scmp.ne.s32.totalorder %s34, %s35
    %p49 = scmp.eq.s32.totalorder %s13, 1
    %p50 = por %p48, %p49
    %p52 = scmp.ne.s32.totalorder %s35, %s51
    %p53 = scmp.eq.s32.totalorder %s13, 0
    %p54 = por %p52, %p53
    %s55 = ssub.s32 %s14, %s26
    %s56 = ssub.s32 %s15, %s22
    %s57 = sor.u32 %s55, %s56
    %p58 = scmp.eq.s32.totalorder %s57, 0
    %s60 = sadd.s32 %s59, 1
    %s61 = scalar_select %p58, %s59, %s60
    %p64 = pneg %p58
    %p65 = scmp.eq.s32.totalorder %s7, 1
    %p66 = por %p64, %p65
    %p67 = scmp.ne.s32.totalorder %s59, %s62
    %p68 = scmp.eq.s32.totalorder %s7, 0
    %p69 = por %p67, %p68
    %p70 = scmp.ne.s32.totalorder %s59, %s62
    %p71 = scmp.eq.s32.totalorder %s12, 1
    %p72 = por %p70, %p71
    %p73 = scmp.ne.s32.totalorder %s62, %s63
    %p74 = scmp.eq.s32.totalorder %s12, 0
    %p75 = por %p73, %p74
    %p76 = scmp.ne.s32.totalorder %s62, %s63
    %p77 = scmp.eq.s32.totalorder %s13, 1
    %p78 = por %p76, %p77
    %p80 = scmp.ne.s32.totalorder %s63, %s79
    %p81 = scmp.eq.s32.totalorder %s13, 0
    %p82 = por %p80, %p81
    %p83 = scmp.le.s32.totalorder 1, %s7
    %p84 = scmp.lt.s32.totalorder %s7, 3
    %p85 = pnand %p83, %p84
    %p86 = pneg %p85
    // Predicated region
    $region9: #{jacobian_of_ddf.1} parent=5 // pred_check
      _
    $region10: #{jacobian_of_ddf.1} parent=5 // pred_check_branch
      %88 = sbr.rel (%p85) target = $region12
    $region11: #{jacobian_of_ddf.1} parent=5 // pred_region
      %s89 = ssub.s32 %s7, 1
    $region12: #{jacobian_of_ddf.1} parent=5 // pred_fallthru
      _
    %p90 = scmp.lt.s32.totalorder %s7, 2
    // Predicated region
    $region13: #{jacobian_of_ddf.1} parent=5 // pred_check
      %p91 = pneg %p90
    $region14: #{jacobian_of_ddf.1} parent=5 // pred_check_branch
      %93 = sbr.rel (%p91) target = $region16
    $region15: #{jacobian_of_ddf.1} parent=5 // pred_region
      // Predicated region
      $region17: #{jacobian_of_ddf.1} parent=15 // pred_check
        %p94 = pneg %p41
      $region18: #{jacobian_of_ddf.1} parent=15 // pred_check_branch
        %96 = sbr.rel (%p94) target = $region20
      $region19: #{jacobian_of_ddf.1} parent=15 // pred_region
        %s97 = smul.u32 2, %s15
        %p98 = scmp.lt.s32.totalorder %s14, 1
        %s99 = scalar_select %p98, %s14, 1
        %p100 = scmp.lt.s32.totalorder %s97, 1
        %s101 = scalar_select %p100, %s97, 1
        %s102 = smul.addr %s101, 2
        %s103 = smul.addr %s99, 12
        %s104 = sadd.s32 %s102, %s103
        %s105 = smul.addr %s104, 8
        %s106 = scalar_lea.vmem %s0, %s105
        %s107 = smul.u32 2, %s15
      $region20: #{jacobian_of_ddf.1} parent=15 // pred_fallthru
        _
    $region16: #{jacobian_of_ddf.1} parent=5 // pred_fallthru
      _
    %p108 = scmp.le.s32.totalorder 1, %s7
    %p109 = scmp.lt.s32.totalorder %s7, 3
    %p110 = pnand %p108, %p109
    %p111 = pneg %p110
    // Predicated region
    $region21: #{jacobian_of_ddf.1} parent=5 // pred_check
      _
    $region22: #{jacobian_of_ddf.1} parent=5 // pred_check_branch
      %113 = sbr.rel (%p110) target = $region24
    $region23: #{jacobian_of_ddf.1} parent=5 // pred_region
      %s114 = ssub.s32 %s7, 1
      %s115 = smul.u32 2, %s17
      %p116 = scmp.lt.s32.totalorder %s16, 1
      %s117 = scalar_select %p116, %s16, 1
      %p118 = scmp.lt.s32.totalorder %s115, 1
      %s119 = scalar_select %p118, %s115, 1
      %s120 = smul.addr %s119, 2
      %s121 = smul.addr %s117, 12
      %s122 = sadd.s32 %s120, %s121
      %s123 = smul.addr %s122, 8
      %s124 = scalar_lea.vmem %s0, %s123
      %p125 = pneg %p47
      %p126 = pneg %p44
      %p127 = pneg %p75
      %p128 = pneg %p72
      %s129 = smul.u32 2, %s17
      %p130 = scmp.lt.s32.totalorder %s16, 1
      %s131 = scalar_select %p130, %s16, 1
      %p132 = scmp.lt.s32.totalorder %s129, 1
      %s133 = scalar_select %p132, %s129, 1
      %s134 = smul.addr %s133, 2
      %s135 = smul.addr %s131, 4
      %s136 = sadd.s32 %s134, %s135
      %s137 = smul.addr %s136, 8
      %s138 = scalar_lea.vmem %s1, %s137
      %s139 = smul.u32 2, %s17
      %p140 = scmp.lt.s32.totalorder %s16, 1
      %s141 = scalar_select %p140, %s16, 1
      %p142 = scmp.lt.s32.totalorder %s139, 1
      %s143 = scalar_select %p142, %s139, 1
      %s144 = smul.addr %s143, 2
      %s145 = smul.addr %s141, 12
      %s146 = sadd.s32 %s144, %s145
      %s147 = smul.addr %s146, 8
      %s148 = scalar_lea.vmem %s0, %s147
      %s149 = smul.u32 2, %s17
      %s150 = smul.u32 2, %s17
      %p151 = scmp.lt.s32.totalorder %s16, 1
      %s152 = scalar_select %p151, %s16, 1
      %p153 = scmp.lt.s32.totalorder %s150, 1
      %s154 = scalar_select %p153, %s150, 1
      %s155 = smul.addr %s154, 2
      %s156 = smul.addr %s152, 4
      %s157 = sadd.s32 %s155, %s156
      %s158 = smul.addr %s157, 8
      %s159 = scalar_lea.vmem %s1, %s158
      %s160 = smul.u32 2, %s17
      %v161 = vld [vmem:[%s148] sm:$0xff]
      %v162 = vld [vmem:[%s148 + $0x8] sm:$0xff]
      %v163 = vld [vmem:[%s148 + $0x10] sm:$0xff]
      %v164 = vld [vmem:[%s148 + $0x18] sm:$0xff]
      %v165 = vld [vmem:[%s148 + $0x20] sm:$0xff]
      %v166 = vld [vmem:[%s148 + $0x28] sm:$0xff]
      %v167 = vld [vmem:[%s148 + $0x30] sm:$0xff]
      %v168 = vld [vmem:[%s148 + $0x38] sm:$0xff]
      %v169 = vld [vmem:[%s148 + $0x40] sm:$0xff]
      %v170 = vld [vmem:[%s148 + $0x48] sm:$0xff]
      %v171 = vld [vmem:[%s148 + $0x50] sm:$0xff]
      %v172 = vld [vmem:[%s148 + $0x58] sm:$0xff]
      %173 = vrot.lane.b32.xlu0 %v161, 112
      %v174 = vpop.permute.xlu0 %173
      %175 = vrot.lane.b32.xlu0 %v163, 112
      %v176 = vpop.permute.xlu0 %175
      %177 = vrot.lane.b32.xlu0 %v165, 112
      %v178 = vpop.permute.xlu0 %177
      %179 = vrot.lane.b32.xlu0 %v167, 112
      %v180 = vpop.permute.xlu0 %179
      %181 = vrot.lane.b32.xlu0 %v169, 112
      %v182 = vpop.permute.xlu0 %181
      %183 = vrot.lane.b32.xlu0 %v171, 112
      %v184 = vpop.permute.xlu0 %183
      %185 = vrot.lane.b32.xlu0 %v162, 112
      %v186 = vpop.permute.xlu0 %185
      %187 = vrot.lane.b32.xlu0 %v164, 112
      %v188 = vpop.permute.xlu0 %187
      %189 = vrot.lane.b32.xlu0 %v166, 112
      %v190 = vpop.permute.xlu0 %189
      %191 = vrot.lane.b32.xlu0 %v168, 112
      %v192 = vpop.permute.xlu0 %191
      %193 = vrot.lane.b32.xlu0 %v170, 112
      %v194 = vpop.permute.xlu0 %193
      %195 = vrot.lane.b32.xlu0 %v172, 112
      %v196 = vpop.permute.xlu0 %195
      %v197 = vlaneseq
      %v198 = vand.u32 %v197, 127
      %vm199 = vcmp.lt.s32.totalorder %v198, 112
      %v200 = vsel %vm199, %v174, %v186
      %v201 = vsel %vm199, %v176, %v188
      %v202 = vsel %vm199, %v178, %v190
      %v203 = vsel %vm199, %v180, %v192
      %v204 = vsel %vm199, %v182, %v194
      %v205 = vsel %vm199, %v184, %v196
      %v206 = vsel %vm199, %v186, %v174
      %v207 = vsel %vm199, %v188, %v176
      %v208 = vsel %vm199, %v190, %v178
      %v209 = vsel %vm199, %v192, %v180
      %v210 = vsel %vm199, %v194, %v182
      %v211 = vsel %vm199, %v196, %v184
      %212 = vrot.lane.b32.xlu0 %v161, 16
      %v213 = vpop.permute.xlu0 %212
      %214 = vrot.lane.b32.xlu0 %v163, 16
      %v215 = vpop.permute.xlu0 %214
      %216 = vrot.lane.b32.xlu0 %v165, 16
      %v217 = vpop.permute.xlu0 %216
      %218 = vrot.lane.b32.xlu0 %v167, 16
      %v219 = vpop.permute.xlu0 %218
      %220 = vrot.lane.b32.xlu0 %v169, 16
      %v221 = vpop.permute.xlu0 %220
      %222 = vrot.lane.b32.xlu0 %v171, 16
      %v223 = vpop.permute.xlu0 %222
      %224 = vrot.lane.b32.xlu0 %v162, 16
      %v225 = vpop.permute.xlu0 %224
      %226 = vrot.lane.b32.xlu0 %v164, 16
      %v227 = vpop.permute.xlu0 %226
      %228 = vrot.lane.b32.xlu0 %v166, 16
      %v229 = vpop.permute.xlu0 %228
      %230 = vrot.lane.b32.xlu0 %v168, 16
      %v231 = vpop.permute.xlu0 %230
      %232 = vrot.lane.b32.xlu0 %v170, 16
      %v233 = vpop.permute.xlu0 %232
      %234 = vrot.lane.b32.xlu0 %v172, 16
      %v235 = vpop.permute.xlu0 %234
      %vm236 = vcmp.lt.s32.totalorder %v198, 16
      %v237 = vsel %vm236, %v213, %v225
      %v238 = vsel %vm236, %v215, %v227
      %v239 = vsel %vm236, %v217, %v229
      %v240 = vsel %vm236, %v219, %v231
      %v241 = vsel %vm236, %v221, %v233
      %v242 = vsel %vm236, %v223, %v235
      %v243 = vsel %vm236, %v225, %v213
      %v244 = vsel %vm236, %v227, %v215
      %v245 = vsel %vm236, %v229, %v217
      %v246 = vsel %vm236, %v231, %v219
      %v247 = vsel %vm236, %v233, %v221
      %v248 = vsel %vm236, %v235, %v223
      %v249 = vsub.f32 %v200, %v243
      %v250 = vsub.f32 %v206, %v237
      %v251 = vsub.f32 %v201, %v244
      %v252 = vsub.f32 %v207, %v238
      %v253 = vsub.f32 %v202, %v245
      %v254 = vsub.f32 %v208, %v239
      %v255 = vsub.f32 %v203, %v246
      %v256 = vsub.f32 %v209, %v240
      %v257 = vsub.f32 %v204, %v247
      %v258 = vsub.f32 %v210, %v241
      %v259 = vsub.f32 %v205, %v248
      %v260 = vsub.f32 %v211, %v242
      %v261 = vmul.f32 %v249, 0.5
      %v262 = vmul.f32 %v250, 0.5
      %v263 = vmul.f32 %v251, 0.5
      %v264 = vmul.f32 %v252, 0.5
      %v265 = vmul.f32 %v253, 0.5
      %v266 = vmul.f32 %v254, 0.5
      %v267 = vmul.f32 %v255, 0.5
      %v268 = vmul.f32 %v256, 0.5
      %v269 = vmul.f32 %v257, 0.5
      %v270 = vmul.f32 %v258, 0.5
      %v271 = vmul.f32 %v259, 0.5
      %v272 = vmul.f32 %v260, 0.5
      %273 = vrot.lane.b32.xlu0 %v161, 127
      %v274 = vpop.permute.xlu0 %273
      %275 = vrot.lane.b32.xlu0 %v163, 127
      %v276 = vpop.permute.xlu0 %275
      %277 = vrot.lane.b32.xlu0 %v165, 127
      %v278 = vpop.permute.xlu0 %277
      %279 = vrot.lane.b32.xlu0 %v167, 127
      %v280 = vpop.permute.xlu0 %279
      %281 = vrot.lane.b32.xlu0 %v169, 127
      %v282 = vpop.permute.xlu0 %281
      %283 = vrot.lane.b32.xlu0 %v171, 127
      %v284 = vpop.permute.xlu0 %283
      %285 = vrot.lane.b32.xlu0 %v162, 127
      %v286 = vpop.permute.xlu0 %285
      %287 = vrot.lane.b32.xlu0 %v164, 127
      %v288 = vpop.permute.xlu0 %287
      %289 = vrot.lane.b32.xlu0 %v166, 127
      %v290 = vpop.permute.xlu0 %289
      %291 = vrot.lane.b32.xlu0 %v168, 127
      %v292 = vpop.permute.xlu0 %291
      %293 = vrot.lane.b32.xlu0 %v170, 127
      %v294 = vpop.permute.xlu0 %293
      %295 = vrot.lane.b32.xlu0 %v172, 127
      %v296 = vpop.permute.xlu0 %295
      %vm297 = vcmp.lt.s32.totalorder %v198, 127
      %v298 = vsel %vm297, %v274, %v286
      %v299 = vsel %vm297, %v276, %v288
      %v300 = vsel %vm297, %v278, %v290
      %v301 = vsel %vm297, %v280, %v292
      %v302 = vsel %vm297, %v282, %v294
      %v303 = vsel %vm297, %v284, %v296
      %v304 = vsel %vm297, %v286, %v274
      %v305 = vsel %vm297, %v288, %v276
      %v306 = vsel %vm297, %v290, %v278
      %v307 = vsel %vm297, %v292, %v280
      %v308 = vsel %vm297, %v294, %v282
      %v309 = vsel %vm297, %v296, %v284
      %310 = vrot.lane.b32.xlu0 %v161, 1
      %v311 = vpop.permute.xlu0 %310
      %312 = vrot.lane.b32.xlu0 %v163, 1
      %v313 = vpop.permute.xlu0 %312
      %314 = vrot.lane.b32.xlu0 %v165, 1
      %v315 = vpop.permute.xlu0 %314
      %316 = vrot.lane.b32.xlu0 %v167, 1
      %v317 = vpop.permute.xlu0 %316
      %318 = vrot.lane.b32.xlu0 %v169, 1
      %v319 = vpop.permute.xlu0 %318
      %320 = vrot.lane.b32.xlu0 %v171, 1
      %v321 = vpop.permute.xlu0 %320
      %322 = vrot.lane.b32.xlu0 %v162, 1
      %v323 = vpop.permute.xlu0 %322
      %324 = vrot.lane.b32.xlu0 %v164, 1
      %v325 = vpop.permute.xlu0 %324
      %326 = vrot.lane.b32.xlu0 %v166, 1
      %v327 = vpop.permute.xlu0 %326
      %328 = vrot.lane.b32.xlu0 %v168, 1
      %v329 = vpop.permute.xlu0 %328
      %330 = vrot.lane.b32.xlu0 %v170, 1
      %v331 = vpop.permute.xlu0 %330
      %332 = vrot.lane.b32.xlu0 %v172, 1
      %v333 = vpop.permute.xlu0 %332
      %vm334 = vcmp.lt.s32.totalorder %v198, 1
      %v335 = vsel %vm334, %v311, %v323
      %v336 = vsel %vm334, %v313, %v325
      %v337 = vsel %vm334, %v315, %v327
      %v338 = vsel %vm334, %v317, %v329
      %v339 = vsel %vm334, %v319, %v331
      %v340 = vsel %vm334, %v321, %v333
      %v341 = vsel %vm334, %v323, %v311
      %v342 = vsel %vm334, %v325, %v313
      %v343 = vsel %vm334, %v327, %v315
      %v344 = vsel %vm334, %v329, %v317
      %v345 = vsel %vm334, %v331, %v319
      %v346 = vsel %vm334, %v333, %v321
      %v347 = vsub.f32 %v298, %v341
      %v348 = vsub.f32 %v304, %v335
      %v349 = vsub.f32 %v299, %v342
      %v350 = vsub.f32 %v305, %v336
      %v351 = vsub.f32 %v300, %v343
      %v352 = vsub.f32 %v306, %v337
      %v353 = vsub.f32 %v301, %v344
      %v354 = vsub.f32 %v307, %v338
      %v355 = vsub.f32 %v302, %v345
      %v356 = vsub.f32 %v308, %v339
      %v357 = vsub.f32 %v303, %v346
      %v358 = vsub.f32 %v309, %v340
      %v359 = vmul.f32 %v347, 0.5
      %v360 = vmul.f32 %v348, 0.5
      %v361 = vmul.f32 %v349, 0.5
      %v362 = vmul.f32 %v350, 0.5
      %v363 = vmul.f32 %v351, 0.5
      %v364 = vmul.f32 %v352, 0.5
      %v365 = vmul.f32 %v353, 0.5
      %v366 = vmul.f32 %v354, 0.5
      %v367 = vmul.f32 %v355, 0.5
      %v368 = vmul.f32 %v356, 0.5
      %v369 = vmul.f32 %v357, 0.5
      %v370 = vmul.f32 %v358, 0.5
      %v371 = vrot.slane %v161, 1
      %v372 = vrot.slane %v162, 1
      %v373 = vrot.slane %v165, 1
      %v374 = vrot.slane %v166, 1
      %v375 = vrot.slane %v169, 1
      %v376 = vrot.slane %v170, 1
      %v377 = vrot.slane %v163, 1
      %v378 = vrot.slane %v164, 1
      %v379 = vrot.slane %v167, 1
      %v380 = vrot.slane %v168, 1
      %v381 = vrot.slane %v171, 1
      %v382 = vrot.slane %v172, 1
      %v383 = vlaneseq
      %v384 = vshrl.u32 %v383, 7
      %vm385 = vcmp.lt.s32.totalorder %v384, 7
      %v386 = vsel %vm385, %v371, %v377
      %v387 = vsel %vm385, %v372, %v378
      %v388 = vsel %vm385, %v373, %v379
      %v389 = vsel %vm385, %v374, %v380
      %v390 = vsel %vm385, %v375, %v381
      %v391 = vsel %vm385, %v376, %v382
      %v392 = vsel %vm385, %v377, %v371
      %v393 = vsel %vm385, %v378, %v372
      %v394 = vsel %vm385, %v379, %v373
      %v395 = vsel %vm385, %v380, %v374
      %v396 = vsel %vm385, %v381, %v375
      %v397 = vsel %vm385, %v382, %v376
      %v398 = vrot.slane %v161, 7
      %v399 = vrot.slane %v162, 7
      %v400 = vrot.slane %v165, 7
      %v401 = vrot.slane %v166, 7
      %v402 = vrot.slane %v169, 7
      %v403 = vrot.slane %v170, 7
      %v404 = vrot.slane %v163, 7
      %v405 = vrot.slane %v164, 7
      %v406 = vrot.slane %v167, 7
      %v407 = vrot.slane %v168, 7
      %v408 = vrot.slane %v171, 7
      %v409 = vrot.slane %v172, 7
      %vm410 = vcmp.lt.s32.totalorder %v384, 1
      %v411 = vsel %vm410, %v398, %v404
      %v412 = vsel %vm410, %v399, %v405
      %v413 = vsel %vm410, %v400, %v406
      %v414 = vsel %vm410, %v401, %v407
      %v415 = vsel %vm410, %v402, %v408
      %v416 = vsel %vm410, %v403, %v409
      %v417 = vsel %vm410, %v404, %v398
      %v418 = vsel %vm410, %v405, %v399
      %v419 = vsel %vm410, %v406, %v400
      %v420 = vsel %vm410, %v407, %v401
      %v421 = vsel %vm410, %v408, %v402
      %v422 = vsel %vm410, %v409, %v403
      %v423 = vsub.f32 %v386, %v417
      %v424 = vsub.f32 %v387, %v418
      %v425 = vsub.f32 %v392, %v411
      %v426 = vsub.f32 %v393, %v412
      %v427 = vsub.f32 %v388, %v419
      %v428 = vsub.f32 %v389, %v420
      %v429 = vsub.f32 %v394, %v413
      %v430 = vsub.f32 %v395, %v414
      %v431 = vsub.f32 %v390, %v421
      %v432 = vsub.f32 %v391, %v422
      %v433 = vsub.f32 %v396, %v415
      %v434 = vsub.f32 %v397, %v416
      %v435 = vmul.f32 %v423, 0.5
      %v436 = vmul.f32 %v424, 0.5
      %v437 = vmul.f32 %v425, 0.5
      %v438 = vmul.f32 %v426, 0.5
      %v439 = vmul.f32 %v427, 0.5
      %v440 = vmul.f32 %v428, 0.5
      %v441 = vmul.f32 %v429, 0.5
      %v442 = vmul.f32 %v430, 0.5
      %v443 = vmul.f32 %v431, 0.5
      %v444 = vmul.f32 %v432, 0.5
      %v445 = vmul.f32 %v433, 0.5
      %v446 = vmul.f32 %v434, 0.5
      %v447 = vadd.f32 %v265, 1.0
      %v448 = vadd.f32 %v266, 1.0
      %v449 = vadd.f32 %v267, 1.0
      %v450 = vadd.f32 %v268, 1.0
      %v451 = vadd.f32 %v367, 1.0
      %v452 = vadd.f32 %v368, 1.0
      %v453 = vadd.f32 %v369, 1.0
      %v454 = vadd.f32 %v370, 1.0
      %v455 = vmul.f32 %v447, %v451
      %v456 = vmul.f32 %v448, %v452
      %v457 = vmul.f32 %v449, %v453
      %v458 = vmul.f32 %v450, %v454
      %v459 = vmul.f32 %v363, %v269
      %v460 = vmul.f32 %v364, %v270
      %v461 = vmul.f32 %v365, %v271
      %v462 = vmul.f32 %v366, %v272
      %v463 = vsub.f32 %v455, %v459
      %v464 = vsub.f32 %v456, %v460
      %v465 = vsub.f32 %v457, %v461
      %v466 = vsub.f32 %v458, %v462
      %v467 = vmul.f32 %v261, %v451
      %v468 = vmul.f32 %v262, %v452
      %v469 = vmul.f32 %v263, %v453
      %v470 = vmul.f32 %v264, %v454
      %v471 = vmul.f32 %v359, %v269
      %v472 = vmul.f32 %v360, %v270
      %v473 = vmul.f32 %v361, %v271
      %v474 = vmul.f32 %v362, %v272
      %v475 = vsub.f32 %v467, %v471
      %v476 = vsub.f32 %v468, %v472
      %v477 = vsub.f32 %v469, %v473
      %v478 = vsub.f32 %v470, %v474
      %v479 = vmul.f32 %v261, %v363
      %v480 = vmul.f32 %v262, %v364
      %v481 = vmul.f32 %v263, %v365
      %v482 = vmul.f32 %v264, %v366
      %v483 = vmul.f32 %v359, %v447
      %v484 = vmul.f32 %v360, %v448
      %v485 = vmul.f32 %v361, %v449
      %v486 = vmul.f32 %v362, %v450
      %v487 = vsub.f32 %v479, %v483
      %v488 = vsub.f32 %v480, %v484
      %v489 = vsub.f32 %v481, %v485
      %v490 = vsub.f32 %v482, %v486
      %v491 = vadd.f32 %v435, 1.0
      %v492 = vadd.f32 %v436, 1.0
      %v493 = vadd.f32 %v437, 1.0
      %v494 = vadd.f32 %v438, 1.0
      %v495 = vmul.f32 %v491, %v463
      %v496 = vmul.f32 %v492, %v464
      %v497 = vmul.f32 %v493, %v465
      %v498 = vmul.f32 %v494, %v466
      %v499 = vmul.f32 %v439, %v475
      %v500 = vmul.f32 %v440, %v476
      %v501 = vmul.f32 %v441, %v477
      %v502 = vmul.f32 %v442, %v478
      %v503 = vsub.f32 %v495, %v499
      %v504 = vsub.f32 %v496, %v500
      %v505 = vsub.f32 %v497, %v501
      %v506 = vsub.f32 %v498, %v502
      %v507 = vmul.f32 %v443, %v487
      %v508 = vmul.f32 %v444, %v488
      %v509 = vmul.f32 %v445, %v489
      %v510 = vmul.f32 %v446, %v490
      %v511 = vadd.f32 %v503, %v507
      %v512 = vadd.f32 %v504, %v508
      %v513 = vadd.f32 %v505, %v509
      %v514 = vadd.f32 %v506, %v510
      %v515 = vadd.s32 %v198, 128
      %vm516 = vcmp.lt.s32.totalorder %v198, 0
      %v517 = vsub.s32 0, %v198
      %v518 = vsel %vm516, %v517, %v198
      %v519 = vshrl.u32 %v518, 4
      %v520 = vand.u32 %v518, 15
      %v521 = vsub.s32 0, %v520
      %v522 = vsel %vm516, %v521, %v520
      %vm523 = vcmp.lt.s32.totalorder %v515, 0
      %v524 = vsub.s32 0, %v515
      %v525 = vsel %vm523, %v524, %v515
      %v526 = vshrl.u32 %v525, 4
      %v527 = vand.u32 %v525, 15
      %v528 = vsub.s32 0, %v527
      %v529 = vsel %vm523, %v528, %v527
      %vm530 = vcmp.ne.s32.totalorder %v522, 0
      %vm531 = vcmp.ne.s32.totalorder %v529, 0
      %vm532 = vcmp.lt.s32.totalorder %v522, 0
      %vm533 = vcmp.lt.s32.totalorder %v529, 0
      %vm534 = vmand %vm532, %vm530
      %vm535 = vmand %vm533, %vm531
      %v536 = vadd.s32 %v522, 16
      %v537 = vadd.s32 %v529, 16
      %v538 = vsel %vm534, %v536, %v522
      %v539 = vsel %vm535, %v537, %v529
      %vm540 = vcmp.eq.s32.totalorder %v538, 0
      %vm541 = vcmp.eq.s32.totalorder %v539, 0
      %542 = vrot.lane.b32.xlu0 %v511, 127
      %v543 = vpop.permute.xlu0 %542
      %544 = vrot.lane.b32.xlu0 %v513, 127
      %v545 = vpop.permute.xlu0 %544
      %546 = vrot.lane.b32.xlu0 %v512, 127
      %v547 = vpop.permute.xlu0 %546
      %548 = vrot.lane.b32.xlu0 %v514, 127
      %v549 = vpop.permute.xlu0 %548
      %v550 = vsel %vm297, %v543, %v547
      %v551 = vsel %vm297, %v545, %v549
      %v552 = vsel %vm297, %v547, %v543
      %v553 = vsel %vm297, %v549, %v545
      %vm554 = vcmp.eq.s32.totalorder %v538, 15
      %vm555 = vcmp.eq.s32.totalorder %v539, 15
      %556 = vrot.lane.b32.xlu0 %v511, 1
      %v557 = vpop.permute.xlu0 %556
      %558 = vrot.lane.b32.xlu0 %v513, 1
      %v559 = vpop.permute.xlu0 %558
      %560 = vrot.lane.b32.xlu0 %v512, 1
      %v561 = vpop.permute.xlu0 %560
      %562 = vrot.lane.b32.xlu0 %v514, 1
      %v563 = vpop.permute.xlu0 %562
      %v564 = vsel %vm334, %v557, %v561
      %v565 = vsel %vm334, %v559, %v563
      %v566 = vsel %vm334, %v561, %v557
      %v567 = vsel %vm334, %v563, %v559
      %v568 = vsel %vm554, %v566, %v511
      %v569 = vsel %vm555, %v564, %v512
      %v570 = vsel %vm554, %v567, %v513
      %v571 = vsel %vm555, %v565, %v514
      %v572 = vsel %vm540, %v550, %v568
      %v573 = vsel %vm541, %v552, %v569
      %v574 = vsel %vm540, %v551, %v570
      %v575 = vsel %vm541, %v553, %v571
      %vm576 = vcmp.lt.s32.totalorder %v515, 16
      %577 = vrot.lane.b32.xlu0 %v572, 112
      %v578 = vpop.permute.xlu0 %577
      %579 = vrot.lane.b32.xlu0 %v574, 112
      %v580 = vpop.permute.xlu0 %579
      %581 = vrot.lane.b32.xlu0 %v573, 112
      %v582 = vpop.permute.xlu0 %581
      %583 = vrot.lane.b32.xlu0 %v575, 112
      %v584 = vpop.permute.xlu0 %583
      %v585 = vsel %vm199, %v578, %v582
      %v586 = vsel %vm199, %v580, %v584
      %v587 = vsel %vm199, %v582, %v578
      %v588 = vsel %vm199, %v584, %v580
      %vm589 = vcmp.ge.s32.totalorder %v198, 240
      %vm590 = vcmp.ge.s32.totalorder %v515, 240
      %591 = vrot.lane.b32.xlu0 %v572, 16
      %v592 = vpop.permute.xlu0 %591
      %593 = vrot.lane.b32.xlu0 %v574, 16
      %v594 = vpop.permute.xlu0 %593
      %595 = vrot.lane.b32.xlu0 %v573, 16
      %v596 = vpop.permute.xlu0 %595
      %597 = vrot.lane.b32.xlu0 %v575, 16
      %v598 = vpop.permute.xlu0 %597
      %v599 = vsel %vm236, %v592, %v596
      %v600 = vsel %vm236, %v594, %v598
      %v601 = vsel %vm236, %v596, %v592
      %v602 = vsel %vm236, %v598, %v594
      %v603 = vsel %vm589, %v601, %v572
      %v604 = vsel %vm590, %v599, %v573
      %v605 = vsel %vm589, %v602, %v574
      %v606 = vsel %vm590, %v600, %v575
      %v607 = vsel %vm236, %v585, %v603
      %v608 = vsel %vm576, %v587, %v604
      %v609 = vsel %vm236, %v586, %v605
      %v610 = vsel %vm576, %v588, %v606
      %611 = vst [vmem:[%s159] sm:$0xff] %v607
      %612 = vst [vmem:[%s159 + $0x8] sm:$0xff] %v608
      %613 = vst [vmem:[%s159 + $0x10] sm:$0xff] %v609
      %614 = vst [vmem:[%s159 + $0x18] sm:$0xff] %v610
      %p615 = scmp.eq.s32.totalorder %s17, 0
      // Predicated region
      $region25: #{jacobian_of_ddf.1} parent=23 // pred_check
        %p616 = pneg %p615
      $region26: #{jacobian_of_ddf.1} parent=23 // pred_check_branch
        %618 = sbr.rel (%p616) target = $region28
      $region27: #{jacobian_of_ddf.1} parent=23 // pred_region
        %621 = vst [vmem:[#allocation1] sm:$0xff] %v607
        %622 = vst [vmem:[#allocation1 + $0x9] sm:$0xff] %v608
        %s623 = scalar_lea.vmem [#allocation1], 1
        %v624 = vld [vmem:[%s623] ss:$9 sm:$0xff]
        %v626 = vlaneseq
        %vm627 = vcmp.ge.s32.totalorder %v626, 0
        %vm628 = vcmp.lt.s32.totalorder %v626, 256
        %vm629 = vmand %vm627, %vm628
        %630 = vst.msk [vmem:[%s159] ss:$8 sm:$0x3] %vm629, %v624
        %631 = vst.msk [vmem:[%s159] ss:$8 sm:$0x0] %vm629, %v624
        %634 = vst [vmem:[#allocation1] sm:$0xff] %v609
        %635 = vst [vmem:[#allocation1 + $0x9] sm:$0xff] %v610
        %s636 = scalar_lea.vmem [#allocation1], 6
        %v637 = vld [vmem:[%s636] ss:$9 sm:$0xff]
        %s639 = scalar_lea.vmem %s159, 23
        %640 = vst.msk [vmem:[%s639] ss:$8 sm:$0x3] %vm629, %v637
        %641 = vst.msk [vmem:[%s639] ss:$8 sm:$0x0] %vm629, %v637
      $region28: #{jacobian_of_ddf.1} parent=23 // pred_fallthru
        _
      %s642 = smul.u32 2, %s17
      %p643 = scmp.lt.s32.totalorder %s16, 1
      %s644 = scalar_select %p643, %s16, 1
      %p645 = scmp.lt.s32.totalorder %s642, 1
      %s646 = scalar_select %p645, %s642, 1
      %s647 = smul.addr %s646, 2
      %s648 = smul.addr %s644, 4
      %s649 = sadd.s32 %s647, %s648
      %s650 = smul.addr %s649, 8
      %s651 = scalar_lea.vmem %s1, %s650
      // Predicated region
      $region29: #{jacobian_of_ddf.1} parent=23 // pred_check
        %p652 = pneg %p72
      $region30: #{jacobian_of_ddf.1} parent=23 // pred_check_branch
        %654 = sbr.rel (%p652) target = $region32
      $region31: #{jacobian_of_ddf.1} parent=23 // pred_region
        %s655 = smul.u32 2, %s17
      $region32: #{jacobian_of_ddf.1} parent=23 // pred_fallthru
        _
    $region24: #{jacobian_of_ddf.1} parent=5 // pred_fallthru
      _
    %p656 = scmp.le.s32.totalorder 2, %s7
    // Predicated region
    $region33: #{jacobian_of_ddf.1} parent=5 // pred_check
      %p657 = pneg %p656
    $region34: #{jacobian_of_ddf.1} parent=5 // pred_check_branch
      %659 = sbr.rel (%p657) target = $region36
    $region35: #{jacobian_of_ddf.1} parent=5 // pred_region
      %s660 = ssub.s32 %s7, 2
      // Predicated region
      $region37: #{jacobian_of_ddf.1} parent=35 // pred_check
        %p661 = pneg %p78
      $region38: #{jacobian_of_ddf.1} parent=35 // pred_check_branch
        %663 = sbr.rel (%p661) target = $region40
      $region39: #{jacobian_of_ddf.1} parent=35 // pred_region
        %s664 = smul.u32 2, %s19
        %p665 = scmp.lt.s32.totalorder %s18, 1
        %s666 = scalar_select %p665, %s18, 1
        %p667 = scmp.lt.s32.totalorder %s664, 1
        %s668 = scalar_select %p667, %s664, 1
        %s669 = smul.addr %s668, 2
        %s670 = smul.addr %s666, 4
        %s671 = sadd.s32 %s669, %s670
        %s672 = smul.addr %s671, 8
        %s673 = scalar_lea.vmem %s1, %s672
      $region40: #{jacobian_of_ddf.1} parent=35 // pred_fallthru
        _
    $region36: #{jacobian_of_ddf.1} parent=5 // pred_fallthru
      _
  $region6: #{jacobian_of_ddf.1} parent=0 // loop_footer
    %s11 = sadd.s32 1, %s7
  $region7: #{jacobian_of_ddf.1} parent=0 // loop_footer_branch
    %6 = sbr.rel target = $region3
  $region8: #{jacobian_of_ddf.1} parent=0 // loop_exit
    _

</llo_original>
